<compile_context>
chip_gen: v7x
topology: tpu7x:2x2x1
jax: 0.10.0
libtpu: 0.0.40
codegen_flags: <defaults>
</compile_context>

<pallas_src>
import jax
import jax.numpy as jnp
from jax.experimental import pallas as pl
from jax.experimental.pallas import tpu as pltpu


def _copy_kernel(x_ref, o_ref):
    # The grid / index_map already restrict the input window to the
    # un-chomped region, so the body is a single VMEM load + store.
    o_ref[...] = x_ref[...]


def _round_up(x: int, m: int) -> int:
    return ((x + m - 1) // m) * m


# Per-tile VMEM budget (bytes). 2 MiB per tile -> with input + output each
# double-buffered that is ~8 MiB of VMEM, comfortably inside the default
# scoped limit on every current TPU generation.
_TILE_BYTES = 2 * 1024 * 1024
_TM_MAX = 256  # sublane-axis (row) cap


def chomp1d(x: jax.Array, chomp_size: int) -> jax.Array:
    """Equivalent of Chomp1d(chomp_size)(x) for x of shape (N, C, L)."""
    if chomp_size < 0:
        raise ValueError("chomp_size must be non-negative")
    n, c, l = x.shape

    # PyTorch slicing semantics: x[..., :-0] and chomp_size >= L both yield an
    # empty tensor along the length axis; no kernel needed for empty outputs.
    if chomp_size == 0 or chomp_size >= l:
        return x[:, :, :0]

    l_out = l - chomp_size
    rows = n * c
    x2 = x.reshape(rows, l)  # free, contiguous reshape

    itemsize = jnp.dtype(x.dtype).itemsize
    # Sublane packing multiple per dtype: 8 (f32), 16 (bf16/f16), 32 (int8).
    packing = max(8, 32 // max(itemsize, 1))

    # Row tile: sublane-dense, capped at _TM_MAX rows.
    tm = min(_TM_MAX, _round_up(rows, packing))
    # Length tile: lane-dense (multiple of 128), sized so tm*tl fits the
    # per-tile byte budget. Narrower dtypes automatically get wider tiles.
    tl_cap = max(128, (_TILE_BYTES // (tm * itemsize)) // 128 * 128)
    tl = min(tl_cap, _round_up(l_out, 128))

    grid = (pl.cdiv(rows, tm), pl.cdiv(l_out, tl))

    # Pure bandwidth: one read + one write of the kept region.
    bytes_accessed = 2 * rows * l_out * itemsize

    out2 = pl.pallas_call(
        _copy_kernel,
        out_shape=jax.ShapeDtypeStruct((rows, l_out), x.dtype),
        grid=grid,
        # Input uses the same block index as the output, so the chomped tail
        # of the length axis is never read from HBM (only the last partial
        # tile over-reads up to tl-1 columns, which are masked on writeback).
        in_specs=[pl.BlockSpec((tm, tl), lambda i, j: (i, j))],
        out_specs=pl.BlockSpec((tm, tl), lambda i, j: (i, j)),
        compiler_params=pltpu.CompilerParams(
            dimension_semantics=("parallel", "parallel"),
        ),
        cost_estimate=pl.CostEstimate(
            flops=0, transcendentals=0, bytes_accessed=bytes_accessed),
    )(x2)

    return out2.reshape(n, c, l_out)


if __name__ == "__main__":
    key = jax.random.PRNGKey(0)

    # Small shapes consistent with a TCN residual block input: (N=2, C=4, L=16)
    N, C, L = 2, 4, 16
    chomp_size = 3
    x = jax.random.normal(key, (N, C, L), dtype=jnp.float32)

    y = jax.block_until_ready(chomp1d(x, chomp_size))
    y_ref = x[:, :, :-chomp_size]
    assert y.shape == (N, C, L - chomp_size), y.shape
    assert y.dtype == x.dtype
    assert jnp.array_equal(y, y_ref), "Pallas chomp output mismatch (small case)"

    # Second check that exercises a multi-tile grid along the length axis
    # (still modest in size: 32 x 3000 f32 ~= 384 KiB).
    key2 = jax.random.PRNGKey(0)
    N2, C2, L2, chomp2 = 4, 8, 3000, 100
    x2 = jax.random.normal(key2, (N2, C2, L2), dtype=jnp.float32)
    y2 = jax.block_until_ready(chomp1d(x2, chomp2))
    y2_ref = x2[:, :, :-chomp2]
    assert y2.shape == (N2, C2, L2 - chomp2), y2.shape
    assert jnp.array_equal(y2, y2_ref), "Pallas chomp output mismatch (tiled case)"

    # Third check: bf16 dtype, ragged row count (exercises padded sublane tile).
    x3 = jax.random.normal(jax.random.PRNGKey(0), (3, 5, 260), dtype=jnp.bfloat16)
    y3 = jax.block_until_ready(chomp1d(x3, 4))
    assert jnp.array_equal(y3, x3[:, :, :-4]), "Pallas chomp output mismatch (bf16 case)"

    print("KERNEL_OK")
</pallas_src>

<mosaic_0001>
module attributes {stable_mosaic.version = 11 : i64} {
  func.func @_copy_kernel(%arg0: i32, %arg1: i32, %arg2: memref<8x128xf32, #tpu.memory_space<vmem>>, %arg3: memref<8x128xf32, #tpu.memory_space<vmem>>) attributes {dimension_semantics = [#tpu.dimension_semantics<parallel>, #tpu.dimension_semantics<parallel>], iteration_bounds = array<i64: 1, 1>, scalar_prefetch = 0 : i64, scratch_operands = 0 : i64, tpu.core_type = #tpu.core_type<tc>, window_params = [{transform_indices = @transform_0, window_bounds = array<i64: 8, 128>}, {transform_indices = @transform_1, window_bounds = array<i64: 8, 128>}]} {
    %c0 = arith.constant 0 : index
    %c0_0 = arith.constant 0 : index
    %0 = vector.load %arg2[%c0, %c0_0] : memref<8x128xf32, #tpu.memory_space<vmem>>, vector<8x128xf32>
    %c0_1 = arith.constant 0 : index
    %c0_2 = arith.constant 0 : index
    %1 = vector.load %arg3[%c0_1, %c0_2] : memref<8x128xf32, #tpu.memory_space<vmem>>, vector<8x128xf32>
    tpu.vector_store %arg3[%c0_1, %c0_2], %0 {strides = array<i32>} : memref<8x128xf32, #tpu.memory_space<vmem>>, vector<8x128xf32>,
    return
  }
  func.func @transform_0(%arg0: i32, %arg1: i32) -> (i32, i32) {
    %c0_i32 = arith.constant 0 : i32
    return %arg0, %arg1 : i32, i32
  }
  func.func @transform_1(%arg0: i32, %arg1: i32) -> (i32, i32) {
    %c0_i32 = arith.constant 0 : i32
    return %arg0, %arg1 : i32, i32
  }
}

</mosaic_0001>

<llo_original>
// kernel: tpu_custom_call.1
$region0: #{tpu_custom_call.1}
  #allocation0 [shape = 'u32[]', space=smem, size = 0x4, offset = 0x4, fixed_abs, tag = 'smem constant byte address 0x4 - core index']
  #allocation1 [shape = 'u32[144,128]{1,0:T(1,128)}', space=vmem, size = 0x12000, scoped, tag = 'internal scratch']
  %s0 = inlined_call_operand.hbm [shape: f32[8,16], index: 0, kind: input, shape index: {}]
  %s1 = inlined_call_operand.hbm [shape: f32[8,13], index: 1, kind: output, shape index: {}]
  %s2 = sld [smem:[#allocation0]]
  $region18: #{tpu_custom_call.1} parent=0
    _
  %s4 = ssub.s32 1, %s2
  %s5 = scalar_select 0, %s4, %s2
  $region1: #{tpu_custom_call.1} parent=0
    #allocation2 [shape = 'u8[4096]{0}', space=vmem, size = 0x1000, scoped, tag = 'input window, operand 0, single buffered']
    #allocation3 [shape = 's32[1]{0}', space=sflag, size = 0x4, scoped, tag = 'scoped memory for tpu_custom_call.1']
    #allocation4 [shape = 's32[1]{0}', space=sflag, size = 0x4, scoped, tag = 'scoped memory for tpu_custom_call.1']
    #allocation5 [shape = 'u8[4096]{0}', space=vmem, size = 0x1000, scoped, tag = 'output window, operand 0, single buffered']
    %6 = vsyncpa [#allocation3], 0
    %7 = vsyncpa [#allocation4], 0
    // Predicated region
    $region2: #{tpu_custom_call.1} parent=1 // pred_check
      _
    $region3: #{tpu_custom_call.1} parent=1 // pred_check_branch
      %9 = sbr.rel (0) target = $region5
    $region4: #{tpu_custom_call.1} parent=1 // pred_region
      %s11 = ssub.s32 128, 128
      %12 = vsyncadd [#allocation3], %s11
      %s14 = sshll.u32 [#allocation2], 4
      %s15 = int_to_ptr.vmem [resolvable:$true] %s14
      %17 = dma.hbm_to_vmem [thread:$0]  %s0, 128, %s15, [#allocation3]
    $region5: #{tpu_custom_call.1} parent=1 // pred_fallthru
      _
    // Predicated region
    $region6: #{tpu_custom_call.1} parent=1 // pred_check
      _
    $region7: #{tpu_custom_call.1} parent=1 // pred_check_branch
      %19 = sbr.rel (0) target = $region9
    $region8: #{tpu_custom_call.1} parent=1 // pred_region
      %20 = dma.done [#allocation3], 128
    $region9: #{tpu_custom_call.1} parent=1 // pred_fallthru
      _
    %v21 = vld [vmem:[#allocation2] sm:$0xff]
    %22 = vst [vmem:[#allocation5] sm:$0xff] %v21
    // Predicated region
    $region10: #{tpu_custom_call.1} parent=1 // pred_check
      _
    $region11: #{tpu_custom_call.1} parent=1 // pred_check_branch
      %24 = sbr.rel (0) target = $region13
    $region12: #{tpu_custom_call.1} parent=1 // pred_region
      %s26 = ssub.s32 128, 128
      %27 = vsyncadd [#allocation4], %s26
      %s29 = sshll.u32 [#allocation5], 4
      %s30 = int_to_ptr.vmem [resolvable:$true] %s29
      %32 = dma.vmem_to_hbm [thread:$0]  %s30, 128, %s1, [#allocation4]
    $region13: #{tpu_custom_call.1} parent=1 // pred_fallthru
      _
    // Predicated region
    $region14: #{tpu_custom_call.1} parent=1 // pred_check
      _
    $region15: #{tpu_custom_call.1} parent=1 // pred_check_branch
      %34 = sbr.rel (0) target = $region17
    $region16: #{tpu_custom_call.1} parent=1 // pred_region
      %35 = dma.done [#allocation4], 128
    $region17: #{tpu_custom_call.1} parent=1 // pred_fallthru
      _
    %36 = vsyncpa [#allocation3], 1
    %37 = vsyncpa [#allocation4], 1

</llo_original>
